<compile_context>
chip_gen: v7x
topology: tpu7x:2x2x1
jax: 0.10.0
libtpu: 0.0.40
codegen_flags: <defaults>
</compile_context>

<pallas_src>
import functools

import jax
import jax.numpy as jnp
from jax.experimental import pallas as pl
from jax.experimental.pallas import tpu as pltpu


def _round_up(x, m):
    return (x + m - 1) // m * m


# ----------------------------------------------------------------------------
# Pallas kernel: entire FND forward pass (single invocation, everything VMEM)
# ----------------------------------------------------------------------------
def fnd_kernel(arts_ref, act_ref, w_ref, out_ref, *, F1, F2, n_src, H, O, offs):
    off_w1a, off_w1s, off_w2, off_w3 = offs

    arts = arts_ref[...]                                   # (S, F2)

    # packed constant slab, rows 0..4 = row vectors (static slices: free views)
    va = w_ref[0:1, :F2]                                   # (1, F2)   param@Wa (article part)
    vcb = w_ref[1:2, :F1 + 1]                              # (1, F1+1) [param@Wa claim part | param.ba]
    b1 = w_ref[2:3, :H]                                    # (1, H)
    b2 = w_ref[3:4, :H]                                    # (1, H)
    b3 = w_ref[4:5, :O]                                    # (1, O)

    # packed activation slab: row 0 = [claim | 1.0], row 1 = [claim_src | article_src]
    claim1 = act_ref[0:1, :F1 + 1]                         # (1, F1+1)
    srcs = act_ref[1:2, :n_src]                            # (1, Csd+Asd)

    # --- Attn('concat') with the parameter folded into the weights -----------
    # energy_i = param . (Wa [claim; art_i] + ba)
    #          = art_i.va + (claim.vc + param.ba)     (second term is row-constant)
    e_const = jnp.sum(claim1 * vcb, axis=-1, keepdims=True)            # (1, 1)
    energies = jnp.sum(arts * va, axis=-1, keepdims=True) + e_const    # (S, 1)

    # --- softmax over the sequence axis ---------------------------------------
    m = jnp.max(energies, axis=0, keepdims=True)
    ex = jnp.exp(energies - m)
    denom = jnp.sum(ex, axis=0, keepdims=True)                         # (1, 1)
    attn_w = ex * pl.reciprocal(denom, approx=True)                    # (S, 1)

    # --- claim_specific_article = attn_wts.mm(article_inputs) -----------------
    claim_specific = jnp.sum(attn_w * arts, axis=0, keepdims=True)     # (1, F2)

    # --- dense_1 on [claim_specific | claim_source | article_source] ----------
    # (torch.cat removed algebraically; the two source vectors were already
    #  concatenated wrapper-side, so this is 2 matmuls instead of 3)
    w1a = w_ref[off_w1a:off_w1a + F2, :H]                              # (F2, H)
    w1s = w_ref[off_w1s:off_w1s + n_src, :H]                           # (n_src, H)
    h1 = (jnp.dot(claim_specific, w1a, preferred_element_type=jnp.float32)
          + jnp.dot(srcs, w1s, preferred_element_type=jnp.float32)
          + b1)
    h1 = jnp.maximum(h1, 0.0)

    # --- dense_2 + relu --------------------------------------------------------
    w2 = w_ref[off_w2:off_w2 + H, :H]                                  # (H, H)
    h2 = jnp.maximum(
        jnp.dot(h1, w2, preferred_element_type=jnp.float32) + b2, 0.0)

    # --- pred = 5 * sigmoid(Linear(h2)) ---------------------------------------
    w3 = w_ref[off_w3:off_w3 + H, :O]                                  # (H, O)
    logits = jnp.dot(h2, w3, preferred_element_type=jnp.float32) + b3
    out_ref[...] = 5.0 * jax.nn.sigmoid(logits)


# ----------------------------------------------------------------------------
# One-time weight preprocessing (model-load time, NOT in the per-call path)
# ----------------------------------------------------------------------------
def prepare_fnd_params(params, *, claim_feature_size, article_term_dim,
                       claim_source_dim, article_source_dim):
    F1, F2 = claim_feature_size, article_term_dim
    Csd, Asd = claim_source_dim, article_source_dim
    f32 = jnp.float32

    wa = jnp.asarray(params["attn_linear_w"], f32)          # (Ha, F1+F2)
    ba = jnp.asarray(params["attn_linear_b"], f32)          # (Ha,)
    ap = jnp.asarray(params["attn_param"], f32)              # (1, Ha)

    v = (ap @ wa)[0]                                         # (F1+F2,) = param @ Wa
    vc = v[:F1]                                              # claim part
    va = v[F1:]                                              # article part
    b_scalar = jnp.sum(ap[0] * ba)                           # param . ba

    w1 = jnp.asarray(params["dense1_w"], f32)                # (H, F2+Csd+Asd)
    H = w1.shape[0]
    w1a_t = w1[:, :F2].T                                     # (F2, H)
    w1s_t = w1[:, F2:].T                                     # (Csd+Asd, H)
    w2_t = jnp.asarray(params["dense2_w"], f32).T            # (H, H)
    w3_t = jnp.asarray(params["pred_w"], f32).T              # (H, O)
    O = w3_t.shape[1]
    b1 = jnp.asarray(params["dense1_b"], f32)
    b2 = jnp.asarray(params["dense2_b"], f32)
    b3 = jnp.asarray(params["pred_b"], f32)

    # ---- one (R, W) slab holding every constant operand -----------------------
    W = max(F2, F1 + 1, H, O)

    def _row(vec):
        vec = jnp.reshape(vec, (1, -1))
        return jnp.pad(vec, ((0, 0), (0, W - vec.shape[1])))

    vrows = jnp.concatenate(
        [_row(va),
         _row(jnp.concatenate([vc, jnp.reshape(b_scalar, (1,))])),
         _row(b1), _row(b2), _row(b3),
         jnp.zeros((3, W), f32)], axis=0)                    # rows 0..7

    segs = [w1a_t, w1s_t, w2_t, w3_t]
    offs, padded, cur = [], [], 8                            # rows 8.. = matrices
    for s in segs:
        offs.append(cur)
        rows = _round_up(s.shape[0], 8)
        padded.append(jnp.pad(s, ((0, rows - s.shape[0]), (0, W - s.shape[1]))))
        cur += rows
    wslab = jnp.concatenate([vrows] + padded, axis=0)        # (R, W)

    weights = {"wslab": wslab}
    dims = dict(F1=F1, F2=F2, n_src=Csd + Asd, H=H, O=O, offs=tuple(offs))
    return weights, dims


# ----------------------------------------------------------------------------
# Per-call forward: only activation packing + the pallas_call
# ----------------------------------------------------------------------------
def make_fnd_forward(dims):
    kernel = functools.partial(fnd_kernel, **dims)
    O = dims["O"]
    WA = max(dims["F1"] + 1, dims["n_src"])
    vmem = pl.BlockSpec(memory_space=pltpu.MemorySpace.VMEM)

    @jax.jit
    def forward(claim_input, article_inputs, claim_source, article_source, wslab):
        f32 = jnp.float32
        row_claim = jnp.concatenate(
            [claim_input.astype(f32), jnp.ones((1,), f32)])          # (F1+1,)
        row_srcs = jnp.concatenate(
            [claim_source.astype(f32), article_source.astype(f32)])  # (Csd+Asd,)
        act = jnp.stack(
            [jnp.pad(row_claim, (0, WA - row_claim.shape[0])),
             jnp.pad(row_srcs, (0, WA - row_srcs.shape[0]))], axis=0)  # (2, WA)
        arts = article_inputs.astype(f32)                              # (S, F2)

        return pl.pallas_call(
            kernel,
            out_shape=jax.ShapeDtypeStruct((1, O), jnp.float32),
            in_specs=[vmem, vmem, vmem],
            out_specs=vmem,
        )(arts, act, wslab)

    return forward


# ----------------------------------------------------------------------------
# Pure-JAX reference (mirrors the PyTorch forward) for validation
# ----------------------------------------------------------------------------
def fnd_reference(claim_input, article_inputs, claim_source, article_source, params):
    hidden = claim_input[None, :]                                    # (1, F1)
    wa, ba = params["attn_linear_w"], params["attn_linear_b"]
    aparam = params["attn_param"]
    cat = jnp.concatenate(
        [jnp.broadcast_to(hidden, (article_inputs.shape[0], hidden.shape[1])),
         article_inputs], axis=1)
    energy = cat @ wa.T + ba                                         # (S, Ha)
    energies = energy @ aparam[0]                                    # (S,)
    attn_wts = jax.nn.softmax(energies)[None, :]                     # (1, S)
    claim_specific = attn_wts @ article_inputs                       # (1, F2)
    feat = jnp.concatenate(
        [claim_specific, claim_source[None, :], article_source[None, :]], axis=1)
    h1 = jax.nn.relu(feat @ params["dense1_w"].T + params["dense1_b"])
    h2 = jax.nn.relu(h1 @ params["dense2_w"].T + params["dense2_b"])
    return 5.0 * jax.nn.sigmoid(h2 @ params["pred_w"].T + params["pred_b"])


if __name__ == "__main__":
    # Small, forward-consistent sizes.
    S = 8            # number of articles (seq_len)
    F1 = 16          # claim_feature_size
    F2 = 16          # article_term_dim
    Ha = 32          # attn_hidden_size
    Csd = 8          # claim_source_dim
    Asd = 8          # article_source_dim
    H = 32           # hidden_size
    O = 4            # output_size

    key = jax.random.PRNGKey(0)
    ks = jax.random.split(key, 16)

    params = {
        "attn_linear_w": 0.1 * jax.random.normal(ks[0], (Ha, F1 + F2), jnp.float32),
        "attn_linear_b": 0.1 * jax.random.normal(ks[1], (Ha,), jnp.float32),
        "attn_param":    0.1 * jax.random.normal(ks[2], (1, Ha), jnp.float32),
        "dense1_w":      0.1 * jax.random.normal(ks[3], (H, F2 + Csd + Asd), jnp.float32),
        "dense1_b":      0.1 * jax.random.normal(ks[4], (H,), jnp.float32),
        "dense2_w":      0.1 * jax.random.normal(ks[5], (H, H), jnp.float32),
        "dense2_b":      0.1 * jax.random.normal(ks[6], (H,), jnp.float32),
        "pred_w":        0.1 * jax.random.normal(ks[7], (O, H), jnp.float32),
        "pred_b":        0.1 * jax.random.normal(ks[8], (O,), jnp.float32),
    }

    claim_input = jax.random.normal(ks[9], (F1,), jnp.float32)
    article_inputs = jax.random.normal(ks[10], (S, F2), jnp.float32)
    claim_source = jax.random.normal(ks[11], (Csd,), jnp.float32)
    article_source = jax.random.normal(ks[12], (Asd,), jnp.float32)

    # One-time weight preprocessing (outside the per-call path).
    weights, dims = prepare_fnd_params(
        params, claim_feature_size=F1, article_term_dim=F2,
        claim_source_dim=Csd, article_source_dim=Asd)
    fnd_forward = make_fnd_forward(dims)

    pred = fnd_forward(claim_input, article_inputs, claim_source, article_source,
                       weights["wslab"])
    pred = jax.block_until_ready(pred)

    ref = fnd_reference(claim_input, article_inputs, claim_source, article_source, params)
    assert pred.shape == (1, O)
    # Tolerance slightly looser than pure fp32 because the softmax denominator
    # uses pl.reciprocal(approx=True) (EUP fast reciprocal).
    assert jnp.allclose(pred, ref, rtol=5e-3, atol=5e-3), (pred, ref)

    print("KERNEL_OK")
</pallas_src>

<mosaic_0001>
module attributes {stable_mosaic.version = 11 : i64} {
  func.func @fnd_kernel(%arg0: memref<8x16xf32, #tpu.memory_space<vmem>>, %arg1: memref<2x17xf32, #tpu.memory_space<vmem>>, %arg2: memref<104x32xf32, #tpu.memory_space<vmem>>, %arg3: memref<1x4xf32, #tpu.memory_space<vmem>>) attributes {dimension_semantics = [], scalar_prefetch = 0 : i64, scratch_operands = 0 : i64, tpu.core_type = #tpu.core_type<tc>} {
    %c0 = arith.constant 0 : index
    %c0_0 = arith.constant 0 : index
    %0 = vector.load %arg0[%c0, %c0_0] : memref<8x16xf32, #tpu.memory_space<vmem>>, vector<8x16xf32>
    %c0_1 = arith.constant 0 : index
    %c0_2 = arith.constant 0 : index
    %1 = vector.load %arg2[%c0_1, %c0_2] : memref<104x32xf32, #tpu.memory_space<vmem>>, vector<1x16xf32>
    %c1 = arith.constant 1 : index
    %c0_3 = arith.constant 0 : index
    %2 = vector.load %arg2[%c1, %c0_3] : memref<104x32xf32, #tpu.memory_space<vmem>>, vector<1x17xf32>
    %c2 = arith.constant 2 : index
    %c0_4 = arith.constant 0 : index
    %3 = vector.load %arg2[%c2, %c0_4] : memref<104x32xf32, #tpu.memory_space<vmem>>, vector<1x32xf32>
    %c3 = arith.constant 3 : index
    %c0_5 = arith.constant 0 : index
    %4 = vector.load %arg2[%c3, %c0_5] : memref<104x32xf32, #tpu.memory_space<vmem>>, vector<1x32xf32>
    %c4 = arith.constant 4 : index
    %c0_6 = arith.constant 0 : index
    %5 = vector.load %arg2[%c4, %c0_6] : memref<104x32xf32, #tpu.memory_space<vmem>>, vector<1x4xf32>
    %c0_7 = arith.constant 0 : index
    %c0_8 = arith.constant 0 : index
    %6 = vector.load %arg1[%c0_7, %c0_8] : memref<2x17xf32, #tpu.memory_space<vmem>>, vector<1x17xf32>
    %c1_9 = arith.constant 1 : index
    %c0_10 = arith.constant 0 : index
    %7 = vector.load %arg1[%c1_9, %c0_10] : memref<2x17xf32, #tpu.memory_space<vmem>>, vector<1x16xf32>
    %8 = arith.mulf %6, %2 : vector<1x17xf32>
    %cst = arith.constant dense<0.000000e+00> : vector<1xf32>
    %9 = vector.multi_reduction <add>, %8, %cst [1] : vector<1x17xf32> to vector<1xf32>
    %10 = vector.shape_cast %9 : vector<1xf32> to vector<1x1xf32>
    %11 = vector.broadcast %1 : vector<1x16xf32> to vector<8x16xf32>
    %12 = arith.mulf %0, %11 : vector<8x16xf32>
    %cst_11 = arith.constant dense<0.000000e+00> : vector<8xf32>
    %13 = vector.multi_reduction <add>, %12, %cst_11 [1] : vector<8x16xf32> to vector<8xf32>
    %14 = vector.shape_cast %13 : vector<8xf32> to vector<8x1xf32>
    %15 = vector.broadcast %10 : vector<1x1xf32> to vector<8x1xf32>
    %16 = arith.addf %14, %15 : vector<8x1xf32>
    %cst_12 = arith.constant dense<0xFF800000> : vector<1xf32>
    %17 = vector.multi_reduction <maximumf>, %16, %cst_12 [0] : vector<8x1xf32> to vector<1xf32>
    %18 = vector.shape_cast %17 : vector<1xf32> to vector<1x1xf32>
    %19 = vector.broadcast %18 : vector<1x1xf32> to vector<8x1xf32>
    %20 = arith.subf %16, %19 : vector<8x1xf32>
    %21 = math.exp %20 : vector<8x1xf32>
    %cst_13 = arith.constant dense<0.000000e+00> : vector<1xf32>
    %22 = vector.multi_reduction <add>, %21, %cst_13 [0] : vector<8x1xf32> to vector<1xf32>
    %23 = vector.shape_cast %22 : vector<1xf32> to vector<1x1xf32>
    %24 = tpu.reciprocal %23 {approx = true} : vector<1x1xf32> -> vector<1x1xf32>
    %25 = vector.broadcast %24 : vector<1x1xf32> to vector<8x1xf32>
    %26 = arith.mulf %21, %25 : vector<8x1xf32>
    %27 = vector.broadcast %26 : vector<8x1xf32> to vector<8x16xf32>
    %28 = arith.mulf %27, %0 : vector<8x16xf32>
    %cst_14 = arith.constant dense<0.000000e+00> : vector<16xf32>
    %29 = vector.multi_reduction <add>, %28, %cst_14 [0] : vector<8x16xf32> to vector<16xf32>
    %30 = vector.shape_cast %29 : vector<16xf32> to vector<1x16xf32>
    %c8 = arith.constant 8 : index
    %c0_15 = arith.constant 0 : index
    %31 = vector.load %arg2[%c8, %c0_15] : memref<104x32xf32, #tpu.memory_space<vmem>>, vector<16x32xf32>
    %c24 = arith.constant 24 : index
    %c0_16 = arith.constant 0 : index
    %32 = vector.load %arg2[%c24, %c0_16] : memref<104x32xf32, #tpu.memory_space<vmem>>, vector<16x32xf32>
    %cst_17 = arith.constant dense<0.000000e+00> : vector<1x32xf32>
    %33 = tpu.matmul %30, %31, %cst_17 {dimension_numbers = #tpu.dot_dimension_numbers<[1], [0], [0], [1], [0, 0, 1, 1], [], []>} : vector<1x16xf32>, vector<16x32xf32>, vector<1x32xf32> -> vector<1x32xf32>
    %cst_18 = arith.constant dense<0.000000e+00> : vector<1x32xf32>
    %34 = tpu.matmul %7, %32, %cst_18 {dimension_numbers = #tpu.dot_dimension_numbers<[1], [0], [0], [1], [0, 0, 1, 1], [], []>} : vector<1x16xf32>, vector<16x32xf32>, vector<1x32xf32> -> vector<1x32xf32>
    %35 = arith.addf %33, %34 : vector<1x32xf32>
    %36 = arith.addf %35, %3 : vector<1x32xf32>
    %cst_19 = arith.constant 0.000000e+00 : f32
    %37 = vector.broadcast %cst_19 : f32 to vector<1x32xf32>
    %38 = arith.maximumf %36, %37 : vector<1x32xf32>
    %c40 = arith.constant 40 : index
    %c0_20 = arith.constant 0 : index
    %39 = vector.load %arg2[%c40, %c0_20] : memref<104x32xf32, #tpu.memory_space<vmem>>, vector<32x32xf32>
    %cst_21 = arith.constant dense<0.000000e+00> : vector<1x32xf32>
    %40 = tpu.matmul %38, %39, %cst_21 {dimension_numbers = #tpu.dot_dimension_numbers<[1], [0], [0], [1], [0, 0, 1, 1], [], []>} : vector<1x32xf32>, vector<32x32xf32>, vector<1x32xf32> -> vector<1x32xf32>
    %41 = arith.addf %40, %4 : vector<1x32xf32>
    %cst_22 = arith.constant 0.000000e+00 : f32
    %42 = vector.broadcast %cst_22 : f32 to vector<1x32xf32>
    %43 = arith.maximumf %41, %42 : vector<1x32xf32>
    %c72 = arith.constant 72 : index
    %c0_23 = arith.constant 0 : index
    %44 = vector.load %arg2[%c72, %c0_23] : memref<104x32xf32, #tpu.memory_space<vmem>>, vector<32x4xf32>
    %cst_24 = arith.constant dense<0.000000e+00> : vector<1x4xf32>
    %45 = tpu.matmul %43, %44, %cst_24 {dimension_numbers = #tpu.dot_dimension_numbers<[1], [0], [0], [1], [0, 0, 1, 1], [], []>} : vector<1x32xf32>, vector<32x4xf32>, vector<1x4xf32> -> vector<1x4xf32>
    %46 = arith.addf %45, %5 : vector<1x4xf32>
    %47 = arith.negf %46 : vector<1x4xf32>
    %48 = math.exp %47 : vector<1x4xf32>
    %cst_25 = arith.constant 1.000000e+00 : f32
    %49 = vector.broadcast %cst_25 : f32 to vector<1x4xf32>
    %50 = arith.addf %49, %48 : vector<1x4xf32>
    %51 = arith.divf %49, %50 : vector<1x4xf32>
    %cst_26 = arith.constant 5.000000e+00 : f32
    %52 = vector.broadcast %cst_26 : f32 to vector<1x4xf32>
    %53 = arith.mulf %52, %51 : vector<1x4xf32>
    %c0_27 = arith.constant 0 : index
    %c0_28 = arith.constant 0 : index
    %54 = vector.load %arg3[%c0_27, %c0_28] : memref<1x4xf32, #tpu.memory_space<vmem>>, vector<1x4xf32>
    tpu.vector_store %arg3[%c0_27, %c0_28], %53 {strides = array<i32>} : memref<1x4xf32, #tpu.memory_space<vmem>>, vector<1x4xf32>,
    return
  }
}

</mosaic_0001>

<llo_original>
// kernel: forward.1
$region0: #{forward.1}
  #allocation0 [shape = 'u32[]', space=smem, size = 0x4, offset = 0x4, fixed_abs, tag = 'smem constant byte address 0x4 - core index']
  #allocation1 [shape = 'u32[144,128]{1,0:T(1,128)}', space=vmem, size = 0x12000, scoped, tag = 'internal scratch']
  %s0 = inlined_call_operand.vmem [shape: f32[8,16], index: 0, kind: input, shape index: {}]
  %s1 = inlined_call_operand.vmem [shape: f32[2,17], index: 1, kind: input, shape index: {}]
  %s2 = inlined_call_operand.vmem [shape: f32[104,32], index: 2, kind: input, shape index: {}]
  %s3 = inlined_call_operand.hbm [shape: f32[1,4], index: 3, kind: output, shape index: {}]
  %s4 = sld [smem:[#allocation0]]
  $region22: #{forward.1} parent=0
    _
  %s6 = ssub.s32 1, %s4
  %s7 = scalar_select 0, %s6, %s4
  $region1: #{forward.1} parent=0
    #allocation2 [shape = 'u8[512]{0}', space=vmem, size = 0x400, scoped, tag = 'output window, operand 0, single buffered']
    #allocation3 [shape = 's32[1]{0}', space=sflag, size = 0x4, scoped, tag = 'scoped memory for forward.1']
    %8 = vsyncpa [#allocation3], 0
    // Predicated region
    $region2: #{forward.1} parent=1 // pred_check
      _
    $region3: #{forward.1} parent=1 // pred_check_branch
      %10 = sbr.rel (0) target = $region5
    $region4: #{forward.1} parent=1 // pred_region
      _
    $region5: #{forward.1} parent=1 // pred_fallthru
      _
    // Predicated region
    $region6: #{forward.1} parent=1 // pred_check
      _
    $region7: #{forward.1} parent=1 // pred_check_branch
      %12 = sbr.rel (0) target = $region9
    $region8: #{forward.1} parent=1 // pred_region
      _
    $region9: #{forward.1} parent=1 // pred_fallthru
      _
    // Predicated region
    $region10: #{forward.1} parent=1 // pred_check
      _
    $region11: #{forward.1} parent=1 // pred_check_branch
      %14 = sbr.rel (0) target = $region13
    $region12: #{forward.1} parent=1 // pred_region
      _
    $region13: #{forward.1} parent=1 // pred_fallthru
      _
    %v15 = vld [vmem:[%s0] sm:$0xff]
    %v16 = vld [vmem:[%s2] sm:$0x1]
    %v17 = vld [vmem:[%s2 + $0x1] sm:$0x1]
    %v18 = vld [vmem:[%s2 + $0x2] sm:$0x1]
    %v19 = vld [vmem:[%s2 + $0x3] sm:$0x1]
    %v20 = vld [vmem:[%s2 + $0x4] sm:$0x1]
    %v21 = vld [vmem:[%s1] sm:$0x1]
    %v22 = vld [vmem:[%s1 + $0x1] sm:$0x1]
    %v23 = vmul.f32 %v21, %v17
    %vm24 = vcmask 131072
    %v25 = vsel %vm24, %v23, 0.0
    %26 = vadd.xlane.f32.xlu0 %v25
    %v27 = vpop.xlane.xlu0 %26
    %v28 = vlaneseq
    %v29 = vshrl.u32 %v28, 7
    %v30 = vsub.s32 0, %v29
    %v31 = vrot.slane %v16, %v30
    %v32 = vmul.f32 %v15, %v31
    %vm33 = vcmask 130048
    %v34 = vsel %vm33, %v32, 0.0
    %35 = vadd.xlane.f32.xlu0 %v34
    %v36 = vpop.xlane.xlu0 %35
    %v37 = vlaneseq
    %v38 = vshrl.u32 %v37, 7
    %v39 = vsub.s32 0, %v38
    %v40 = vrot.slane %v27, %v39
    %v41 = vadd.f32 %v36, %v40
    %v42 = vrot.slane %v41, 4
    %v43 = vmax.f32 %v41, %v42
    %v44 = vrot.slane %v43, 2
    %v45 = vmax.f32 %v43, %v44
    %v46 = vrot.slane %v45, 1
    %v47 = vmax.f32 %v45, %v46
    %v48 = vsub.f32 %v41, %v47
    %v49 = vmul.f32 %v48, 1.442695
    %v50 = vpow.pop %v49
    %v51 = vrot.slane %v50, 4
    %v52 = vadd.f32 %v50, %v51
    %v53 = vrot.slane %v52, 2
    %v54 = vadd.f32 %v52, %v53
    %v55 = vrot.slane %v54, 1
    %v56 = vadd.f32 %v54, %v55
    %v57 = vrcp.pop %v56
    %v58 = vmul.f32 %v50, %v57
    %v59 = vmul.f32 %v58, %v15
    %v60 = vsel %vm33, %v59, 0.0
    %v61 = vrot.slane %v60, 4
    %v62 = vadd.f32 %v60, %v61
    %v63 = vrot.slane %v62, 2
    %v64 = vadd.f32 %v62, %v63
    %v65 = vrot.slane %v64, 1
    %v66 = vadd.f32 %v64, %v65
    %v67 = vld [vmem:[%s2 + $0x8] sm:$0xff]
    %v68 = vld [vmem:[%s2 + $0x10] sm:$0xff]
    %v69 = vld [vmem:[%s2 + $0x18] sm:$0xff]
    %v70 = vld [vmem:[%s2 + $0x20] sm:$0xff]
    %v72 = vsel %vm33, %v22, 0
    %74 = vmatprep.subr.mxu0 0.0
    %75 = vmatpush1.msra.mxu0 %v69
    %76 = vmatprep.subr.mxu0 0.0
    %77 = vmatpush1.msra.mxu0 %v70
    %78 = vmatprep.subr.mxu0 0.0
    %79 = vmatpush1.msra.mxu0 0.0
    %80 = vmatprep.subr.mxu0 0.0
    %81 = vmatpush1.msra.mxu0 0.0
    %82 = vmatprep.subr.mxu0 0.0
    %83 = vmatpush1.msra.mxu0 0.0
    %84 = vmatprep.subr.mxu0 0.0
    %85 = vmatpush1.msra.mxu0 0.0
    %86 = vmatprep.subr.mxu0 0.0
    %87 = vmatpush1.msra.mxu0 0.0
    %88 = vmatprep.subr.mxu0 0.0
    %89 = vmatpush1.msra.mxu0 0.0
    %90 = vmatprep.subr.mxu0 0.0
    %91 = vmatpush1.msra.mxu0 0.0
    %92 = vmatprep.subr.mxu0 0.0
    %93 = vmatpush1.msra.mxu0 0.0
    %94 = vmatprep.subr.mxu0 0.0
    %95 = vmatpush1.msra.mxu0 0.0
    %96 = vmatprep.subr.mxu0 0.0
    %97 = vmatpush1.msra.mxu0 0.0
    %98 = vmatprep.subr.mxu0 0.0
    %99 = vmatpush1.msra.mxu0 0.0
    %100 = vmatprep.subr.mxu0 0.0
    %101 = vmatpush1.msra.mxu0 0.0
    %102 = vmatprep.subr.mxu0 0.0
    %103 = vmatpush1.msra.mxu0 0.0
    %104 = vmatprep.subr.mxu0 0.0
    %105 = vmatpush1.msra.mxu0 0.0
    %106 = vmatprep.subr.mxu0 0.0
    %107 = vmatpush1.msra.mxu0 0.0
    %108 = vmatprep.subr.mxu0 0.0
    %109 = vmatpush1.msra.mxu0 0.0
    %110 = vmatprep.subr.mxu0 0.0
    %111 = vmatpush1.msra.mxu0 0.0
    %112 = vmatprep.subr.mxu0 0.0
    %113 = vmatpush1.msra.mxu0 0.0
    %114 = vmatprep.subr.mxu0 0.0
    %115 = vmatpush1.msra.mxu0 0.0
    %116 = vmatprep.subr.mxu0 0.0
    %117 = vmatpush1.msra.mxu0 0.0
    %118 = vmatprep.subr.mxu0 0.0
    %119 = vmatpush1.msra.mxu0 0.0
    %120 = vmatprep.subr.mxu0 0.0
    %121 = vmatpush1.msra.mxu0 0.0
    %122 = vmatprep.subr.mxu0 0.0
    %123 = vmatpush1.msra.mxu0 0.0
    %124 = vmatprep.subr.mxu0 0.0
    %125 = vmatpush1.msra.mxu0 0.0
    %126 = vmatprep.subr.mxu0 0.0
    %127 = vmatpush1.msra.mxu0 0.0
    %128 = vmatprep.subr.mxu0 0.0
    %129 = vmatpush1.msra.mxu0 0.0
    %130 = vmatprep.subr.mxu0 0.0
    %131 = vmatpush1.msra.mxu0 0.0
    %132 = vmatprep.subr.mxu0 0.0
    %133 = vmatpush1.msra.mxu0 0.0
    %134 = vmatprep.subr.mxu0 0.0
    %135 = vmatpush1.msra.mxu0 0.0
    %136 = vmatprep.subr.mxu0 0.0
    %137 = vmatpush1.msra.mxu0 0.0
    %138 = vmatprep.mubr.f32.mxu0 0.0
    %139 = vmatmul.mubr.f32.gmra.mrb[0].mxu0 %v72
    %v140 = vpop.f32.mrb[0].mxu0
    %v141 = vadd.f32 0.0, %v140
    %v142 = vpop.f32.mrb[0].mxu0
    %143 = vdwg.mxu0
    %v145 = vsel %vm33, %v66, 0
    %147 = vmatprep.subr.mxu0 0.0
    %148 = vmatpush1.msra.mxu0 %v67
    %149 = vmatprep.subr.mxu0 0.0
    %150 = vmatpush1.msra.mxu0 %v68
    %151 = vmatprep.subr.mxu0 0.0
    %152 = vmatpush1.msra.mxu0 0.0
    %153 = vmatprep.subr.mxu0 0.0
    %154 = vmatpush1.msra.mxu0 0.0
    %155 = vmatprep.subr.mxu0 0.0
    %156 = vmatpush1.msra.mxu0 0.0
    %157 = vmatprep.subr.mxu0 0.0
    %158 = vmatpush1.msra.mxu0 0.0
    %159 = vmatprep.subr.mxu0 0.0
    %160 = vmatpush1.msra.mxu0 0.0
    %161 = vmatprep.subr.mxu0 0.0
    %162 = vmatpush1.msra.mxu0 0.0
    %163 = vmatprep.subr.mxu0 0.0
    %164 = vmatpush1.msra.mxu0 0.0
    %165 = vmatprep.subr.mxu0 0.0
    %166 = vmatpush1.msra.mxu0 0.0
    %167 = vmatprep.subr.mxu0 0.0
    %168 = vmatpush1.msra.mxu0 0.0
    %169 = vmatprep.subr.mxu0 0.0
    %170 = vmatpush1.msra.mxu0 0.0
    %171 = vmatprep.subr.mxu0 0.0
    %172 = vmatpush1.msra.mxu0 0.0
    %173 = vmatprep.subr.mxu0 0.0
    %174 = vmatpush1.msra.mxu0 0.0
    %175 = vmatprep.subr.mxu0 0.0
    %176 = vmatpush1.msra.mxu0 0.0
    %177 = vmatprep.subr.mxu0 0.0
    %178 = vmatpush1.msra.mxu0 0.0
    %179 = vmatprep.subr.mxu0 0.0
    %180 = vmatpush1.msra.mxu0 0.0
    %181 = vmatprep.subr.mxu0 0.0
    %182 = vmatpush1.msra.mxu0 0.0
    %183 = vmatprep.subr.mxu0 0.0
    %184 = vmatpush1.msra.mxu0 0.0
    %185 = vmatprep.subr.mxu0 0.0
    %186 = vmatpush1.msra.mxu0 0.0
    %187 = vmatprep.subr.mxu0 0.0
    %188 = vmatpush1.msra.mxu0 0.0
    %189 = vmatprep.subr.mxu0 0.0
    %190 = vmatpush1.msra.mxu0 0.0
    %191 = vmatprep.subr.mxu0 0.0
    %192 = vmatpush1.msra.mxu0 0.0
    %193 = vmatprep.subr.mxu0 0.0
    %194 = vmatpush1.msra.mxu0 0.0
    %195 = vmatprep.subr.mxu0 0.0
    %196 = vmatpush1.msra.mxu0 0.0
    %197 = vmatprep.subr.mxu0 0.0
    %198 = vmatpush1.msra.mxu0 0.0
    %199 = vmatprep.subr.mxu0 0.0
    %200 = vmatpush1.msra.mxu0 0.0
    %201 = vmatprep.subr.mxu0 0.0
    %202 = vmatpush1.msra.mxu0 0.0
    %203 = vmatprep.subr.mxu0 0.0
    %204 = vmatpush1.msra.mxu0 0.0
    %205 = vmatprep.subr.mxu0 0.0
    %206 = vmatpush1.msra.mxu0 0.0
    %207 = vmatprep.subr.mxu0 0.0
    %208 = vmatpush1.msra.mxu0 0.0
    %209 = vmatprep.subr.mxu0 0.0
    %210 = vmatpush1.msra.mxu0 0.0
    %211 = vmatprep.mubr.f32.mxu0 0.0
    %212 = vmatmul.mubr.f32.gmra.mrb[0].mxu0 %v145
    %v213 = vpop.f32.mrb[0].mxu0
    %v214 = vadd.f32 %v141, %v213
    %v215 = vpop.f32.mrb[0].mxu0
    %216 = vdwg.mxu0
    %v217 = vadd.f32 %v214, %v18
    %v218 = vmax.f32 %v217, 0.0
    %v219 = vld [vmem:[%s2 + $0x28] sm:$0xff]
    %v220 = vld [vmem:[%s2 + $0x30] sm:$0xff]
    %v221 = vld [vmem:[%s2 + $0x38] sm:$0xff]
    %v222 = vld [vmem:[%s2 + $0x40] sm:$0xff]
    %vm223 = vcmask 261120
    %v225 = vsel %vm223, %v218, 0
    %227 = vmatprep.subr.mxu0 0.0
    %228 = vmatpush1.msra.mxu0 %v219
    %229 = vmatprep.subr.mxu0 0.0
    %230 = vmatpush1.msra.mxu0 %v220
    %231 = vmatprep.subr.mxu0 0.0
    %232 = vmatpush1.msra.mxu0 %v221
    %233 = vmatprep.subr.mxu0 0.0
    %234 = vmatpush1.msra.mxu0 %v222
    %235 = vmatprep.subr.mxu0 0.0
    %236 = vmatpush1.msra.mxu0 0.0
    %237 = vmatprep.subr.mxu0 0.0
    %238 = vmatpush1.msra.mxu0 0.0
    %239 = vmatprep.subr.mxu0 0.0
    %240 = vmatpush1.msra.mxu0 0.0
    %241 = vmatprep.subr.mxu0 0.0
    %242 = vmatpush1.msra.mxu0 0.0
    %243 = vmatprep.subr.mxu0 0.0
    %244 = vmatpush1.msra.mxu0 0.0
    %245 = vmatprep.subr.mxu0 0.0
    %246 = vmatpush1.msra.mxu0 0.0
    %247 = vmatprep.subr.mxu0 0.0
    %248 = vmatpush1.msra.mxu0 0.0
    %249 = vmatprep.subr.mxu0 0.0
    %250 = vmatpush1.msra.mxu0 0.0
    %251 = vmatprep.subr.mxu0 0.0
    %252 = vmatpush1.msra.mxu0 0.0
    %253 = vmatprep.subr.mxu0 0.0
    %254 = vmatpush1.msra.mxu0 0.0
    %255 = vmatprep.subr.mxu0 0.0
    %256 = vmatpush1.msra.mxu0 0.0
    %257 = vmatprep.subr.mxu0 0.0
    %258 = vmatpush1.msra.mxu0 0.0
    %259 = vmatprep.subr.mxu0 0.0
    %260 = vmatpush1.msra.mxu0 0.0
    %261 = vmatprep.subr.mxu0 0.0
    %262 = vmatpush1.msra.mxu0 0.0
    %263 = vmatprep.subr.mxu0 0.0
    %264 = vmatpush1.msra.mxu0 0.0
    %265 = vmatprep.subr.mxu0 0.0
    %266 = vmatpush1.msra.mxu0 0.0
    %267 = vmatprep.subr.mxu0 0.0
    %268 = vmatpush1.msra.mxu0 0.0
    %269 = vmatprep.subr.mxu0 0.0
    %270 = vmatpush1.msra.mxu0 0.0
    %271 = vmatprep.subr.mxu0 0.0
    %272 = vmatpush1.msra.mxu0 0.0
    %273 = vmatprep.subr.mxu0 0.0
    %274 = vmatpush1.msra.mxu0 0.0
    %275 = vmatprep.subr.mxu0 0.0
    %276 = vmatpush1.msra.mxu0 0.0
    %277 = vmatprep.subr.mxu0 0.0
    %278 = vmatpush1.msra.mxu0 0.0
    %279 = vmatprep.subr.mxu0 0.0
    %280 = vmatpush1.msra.mxu0 0.0
    %281 = vmatprep.subr.mxu0 0.0
    %282 = vmatpush1.msra.mxu0 0.0
    %283 = vmatprep.subr.mxu0 0.0
    %284 = vmatpush1.msra.mxu0 0.0
    %285 = vmatprep.subr.mxu0 0.0
    %286 = vmatpush1.msra.mxu0 0.0
    %287 = vmatprep.subr.mxu0 0.0
    %288 = vmatpush1.msra.mxu0 0.0
    %289 = vmatprep.subr.mxu0 0.0
    %290 = vmatpush1.msra.mxu0 0.0
    %291 = vmatprep.mubr.f32.mxu0 0.0
    %292 = vmatmul.mubr.f32.gmra.mrb[0].mxu0 %v225
    %v293 = vpop.f32.mrb[0].mxu0
    %v294 = vadd.f32 %v19, %v293
    %v295 = vpop.f32.mrb[0].mxu0
    %296 = vdwg.mxu0
    %v297 = vmax.f32 %v294, 0.0
    %v298 = vld [vmem:[%s2 + $0x48] sm:$0xff]
    %v299 = vld [vmem:[%s2 + $0x50] sm:$0xff]
    %v300 = vld [vmem:[%s2 + $0x58] sm:$0xff]
    %v301 = vld [vmem:[%s2 + $0x60] sm:$0xff]
    %v303 = vsel %vm223, %v297, 0
    %305 = vmatprep.subr.mxu0 0.0
    %306 = vmatpush1.msra.mxu0 %v298
    %307 = vmatprep.subr.mxu0 0.0
    %308 = vmatpush1.msra.mxu0 %v299
    %309 = vmatprep.subr.mxu0 0.0
    %310 = vmatpush1.msra.mxu0 %v300
    %311 = vmatprep.subr.mxu0 0.0
    %312 = vmatpush1.msra.mxu0 %v301
    %313 = vmatprep.subr.mxu0 0.0
    %314 = vmatpush1.msra.mxu0 0.0
    %315 = vmatprep.subr.mxu0 0.0
    %316 = vmatpush1.msra.mxu0 0.0
    %317 = vmatprep.subr.mxu0 0.0
    %318 = vmatpush1.msra.mxu0 0.0
    %319 = vmatprep.subr.mxu0 0.0
    %320 = vmatpush1.msra.mxu0 0.0
    %321 = vmatprep.subr.mxu0 0.0
    %322 = vmatpush1.msra.mxu0 0.0
    %323 = vmatprep.subr.mxu0 0.0
    %324 = vmatpush1.msra.mxu0 0.0
    %325 = vmatprep.subr.mxu0 0.0
    %326 = vmatpush1.msra.mxu0 0.0
    %327 = vmatprep.subr.mxu0 0.0
    %328 = vmatpush1.msra.mxu0 0.0
    %329 = vmatprep.subr.mxu0 0.0
    %330 = vmatpush1.msra.mxu0 0.0
    %331 = vmatprep.subr.mxu0 0.0
    %332 = vmatpush1.msra.mxu0 0.0
    %333 = vmatprep.subr.mxu0 0.0
    %334 = vmatpush1.msra.mxu0 0.0
    %335 = vmatprep.subr.mxu0 0.0
    %336 = vmatpush1.msra.mxu0 0.0
    %337 = vmatprep.subr.mxu0 0.0
    %338 = vmatpush1.msra.mxu0 0.0
    %339 = vmatprep.subr.mxu0 0.0
    %340 = vmatpush1.msra.mxu0 0.0
    %341 = vmatprep.subr.mxu0 0.0
    %342 = vmatpush1.msra.mxu0 0.0
    %343 = vmatprep.subr.mxu0 0.0
    %344 = vmatpush1.msra.mxu0 0.0
    %345 = vmatprep.subr.mxu0 0.0
    %346 = vmatpush1.msra.mxu0 0.0
    %347 = vmatprep.subr.mxu0 0.0
    %348 = vmatpush1.msra.mxu0 0.0
    %349 = vmatprep.subr.mxu0 0.0
    %350 = vmatpush1.msra.mxu0 0.0
    %351 = vmatprep.subr.mxu0 0.0
    %352 = vmatpush1.msra.mxu0 0.0
    %353 = vmatprep.subr.mxu0 0.0
    %354 = vmatpush1.msra.mxu0 0.0
    %355 = vmatprep.subr.mxu0 0.0
    %356 = vmatpush1.msra.mxu0 0.0
    %357 = vmatprep.subr.mxu0 0.0
    %358 = vmatpush1.msra.mxu0 0.0
    %359 = vmatprep.subr.mxu0 0.0
    %360 = vmatpush1.msra.mxu0 0.0
    %361 = vmatprep.subr.mxu0 0.0
    %362 = vmatpush1.msra.mxu0 0.0
    %363 = vmatprep.subr.mxu0 0.0
    %364 = vmatpush1.msra.mxu0 0.0
    %365 = vmatprep.subr.mxu0 0.0
    %366 = vmatpush1.msra.mxu0 0.0
    %367 = vmatprep.subr.mxu0 0.0
    %368 = vmatpush1.msra.mxu0 0.0
    %369 = vmatprep.mubr.f32.mxu0 0.0
    %370 = vmatmul.mubr.f32.gmra.mrb[0].mxu0 %v303
    %v371 = vpop.f32.mrb[0].mxu0
    %v372 = vadd.f32 %v20, %v371
    %v373 = vpop.f32.mrb[0].mxu0
    %374 = vdwg.mxu0
    %v375 = vxor.u32 %v372, 2147483648
    %v376 = vmul.f32 %v375, 1.442695
    %v377 = vpow.pop %v376
    %v378 = vadd.f32 %v377, 1.0
    %v379 = vrcp.pop %v378
    %v380 = vmul.f32 1.0, %v379
    %v381 = vmul.f32 %v380, 5.0
    %vm382 = vcmask 24576
    %383 = vst.msk [vmem:[#allocation2] sm:$0x1] %vm382, %v381
    // Predicated region
    $region14: #{forward.1} parent=1 // pred_check
      _
    $region15: #{forward.1} parent=1 // pred_check_branch
      %385 = sbr.rel (0) target = $region17
    $region16: #{forward.1} parent=1 // pred_region
      %s387 = ssub.s32 16, 16
      %388 = vsyncadd [#allocation3], %s387
      %s390 = sshll.u32 [#allocation2], 4
      %s391 = int_to_ptr.vmem [resolvable:$true] %s390
      %393 = dma.vmem_to_hbm [thread:$0]  %s391, 16, %s3, [#allocation3]
    $region17: #{forward.1} parent=1 // pred_fallthru
      _
    // Predicated region
    $region18: #{forward.1} parent=1 // pred_check
      _
    $region19: #{forward.1} parent=1 // pred_check_branch
      %395 = sbr.rel (0) target = $region21
    $region20: #{forward.1} parent=1 // pred_region
      %396 = dma.done [#allocation3], 16
    $region21: #{forward.1} parent=1 // pred_fallthru
      _
    %397 = vsyncpa [#allocation3], 1

</llo_original>
